<compile_context>
chip_gen: v7x
topology: tpu7x:2x2x1
jax: 0.10.0
libtpu: 0.0.40
codegen_flags: <defaults>
</compile_context>

<pallas_src>
import math

import jax
import jax.numpy as jnp
from jax import lax
from jax.experimental import pallas as pl
from jax.experimental.pallas import tpu as pltpu

EPS = 1e-5
NEG_INF = -1e30   # finite "-inf": NaN-proof even if a row of a tile is fully masked


# ---------------------------------------------------------------------------
# Kernel 1: RMSNorm1 + fused Q/K/V projection, head split done in VMEM
# ---------------------------------------------------------------------------
def rmsnorm_qkv_kernel(x_ref, g1_ref, wqkv_ref, q_ref, k_ref, v_ref):
    x = x_ref[0].astype(jnp.float32)                       # (TS, D)
    d = x.shape[-1]
    inv_rms = lax.rsqrt(jnp.sum(x * x, axis=-1, keepdims=True) / d + EPS)
    xn = ((x * inv_rms) * g1_ref[...]).astype(jnp.bfloat16)

    # One fused (TS, D) @ (D, 2*d_k + d_v) matmul: single wide RHS push, (1,0) contraction.
    qkv = jnp.dot(xn, wqkv_ref[...], preferred_element_type=jnp.float32)

    H = q_ref.shape[1]
    hd_k = q_ref.shape[3]
    hd_v = v_ref.shape[3]
    d_k = H * hd_k
    # Head split here (VMEM lane-slice stores) -> no XLA transpose / extra HBM pass
    # between kernel 1 and the flash-attention kernel.
    for h in range(H):
        q_ref[0, h, :, :] = qkv[:, h * hd_k:(h + 1) * hd_k].astype(q_ref.dtype)
        k_ref[0, h, :, :] = qkv[:, d_k + h * hd_k:d_k + (h + 1) * hd_k].astype(k_ref.dtype)
        v_ref[0, h, :, :] = qkv[:, 2 * d_k + h * hd_v:2 * d_k + (h + 1) * hd_v].astype(v_ref.dtype)


# ---------------------------------------------------------------------------
# Kernel 2: flash causal attention, heads batched, lower-triangular schedule
# ---------------------------------------------------------------------------
def flash_attention_kernel(qi_ref, ki_ref, q_ref, k_ref, v_ref, o_ref,
                           m_sc, l_sc, acc_sc):
    H = q_ref.shape[1]
    tq = q_ref.shape[2]
    tk = k_ref.shape[2]
    hd_v = v_ref.shape[3]

    step = pl.program_id(1)
    qi = qi_ref[step]
    ki = ki_ref[step]
    q_start = qi * tq
    k_start = ki * tk

    @pl.when(ki == 0)
    def _init():
        m_sc[...] = jnp.full_like(m_sc, NEG_INF)
        l_sc[...] = jnp.zeros_like(l_sc)
        acc_sc[...] = jnp.zeros_like(acc_sc)

    def _step(masked):
        q = q_ref[0]                                       # (H, TQ, hd_k) bf16 (pre-scaled)
        k = k_ref[0]                                       # (H, TK, hd_k) bf16
        v = v_ref[0]                                       # (H, TK, hd_v) bf16
        s = jnp.einsum("hqd,hkd->hqk", q, k,
                       preferred_element_type=jnp.float32)            # f32 scores
        if masked:                                         # diagonal tiles only
            row = q_start + lax.broadcasted_iota(jnp.int32, (tq, tk), 0)
            col = k_start + lax.broadcasted_iota(jnp.int32, (tq, tk), 1)
            s = jnp.where(col <= row, s, NEG_INF)          # broadcast over H
        m_prev = m_sc[...]                                 # (H, TQ, 1)
        m_new = jnp.maximum(m_prev, jnp.max(s, axis=-1, keepdims=True))
        alpha = jnp.exp(m_prev - m_new)
        p = jnp.exp(s - m_new)                             # unnormalized probs, f32
        l_sc[...] = alpha * l_sc[...] + jnp.sum(p, axis=-1, keepdims=True)
        acc_sc[...] = alpha * acc_sc[...] + jnp.einsum(
            "hqk,hkd->hqd", p.astype(v.dtype), v,
            preferred_element_type=jnp.float32)
        m_sc[...] = m_new

    # The triangular schedule never emits fully-future tiles; only tiles that straddle
    # the diagonal need the iota/compare/select mask.
    needs_mask = (k_start + tk - 1) > q_start

    @pl.when(needs_mask)
    def _masked():
        _step(True)

    @pl.when(jnp.logical_not(needs_mask))
    def _unmasked():
        _step(False)

    last_ki = (q_start + tq - 1) // tk
    @pl.when(ki == last_ki)
    def _finalize():
        # Normalize after the PV matmul; approx reciprocal runs on the EUP slot.
        # (~1e-3-level relative error in the softmax normalization; fine for bf16 output.)
        inv_l = pl.reciprocal(l_sc[...], approx=True)
        out = acc_sc[...] * inv_l                          # (H, TQ, hd_v) f32
        # Head merge here (VMEM lane-slice stores) -> output is lane-dense (TQ, d_v).
        for h in range(H):
            o_ref[0, :, h * hd_v:(h + 1) * hd_v] = out[h].astype(o_ref.dtype)


# ---------------------------------------------------------------------------
# Kernel 3: W_O projection + residual + RMSNorm2 + SwiGLU (d_ff tiled) + residual
# ---------------------------------------------------------------------------
def out_ffn_kernel(attn_ref, x_ref, wo_ref, g2_ref, w1_ref, w3_ref, w2_ref,
                   o_ref, y1_sc, y1n_sc, acc_sc):
    kf = pl.program_id(2)

    @pl.when(kf == 0)
    def _prologue():
        x = x_ref[0].astype(jnp.float32)                   # (TS, D)
        proj = jnp.dot(attn_ref[0], wo_ref[...],           # (TS, d_v) @ (d_v, D)
                       preferred_element_type=jnp.float32)
        y1 = proj + x                                      # residual 1 (f32)
        y1_sc[...] = y1
        d = y1.shape[-1]
        inv_rms = lax.rsqrt(jnp.sum(y1 * y1, axis=-1, keepdims=True) / d + EPS)
        y1n_sc[...] = ((y1 * inv_rms) * g2_ref[...]).astype(jnp.bfloat16)
        acc_sc[...] = jnp.zeros_like(acc_sc)

    y1n = y1n_sc[...]                                      # (TS, D) bf16
    h1 = jnp.dot(y1n, w1_ref[...], preferred_element_type=jnp.float32)   # (TS, TF)
    h3 = jnp.dot(y1n, w3_ref[...], preferred_element_type=jnp.float32)   # (TS, TF)
    gated = h1 * jax.nn.sigmoid(h1) * h3                   # SiLU(h1) * h3, f32
    acc_sc[...] += jnp.dot(gated.astype(jnp.bfloat16), w2_ref[...],      # (TS, D)
                           preferred_element_type=jnp.float32)

    @pl.when(kf == pl.num_programs(2) - 1)
    def _epilogue():
        o_ref[0] = (acc_sc[...] + y1_sc[...]).astype(o_ref.dtype)        # residual 2


# ---------------------------------------------------------------------------
# Wrapper
# ---------------------------------------------------------------------------
def _tile(dim, target, granule):
    """Largest divisor of `dim` that is <= target and a multiple of `granule`.
    Falls back to the full dimension (always a legal block)."""
    t = min(dim, target)
    for cand in range(t, granule - 1, -1):
        if dim % cand == 0 and cand % granule == 0:
            return cand
    return dim


def _vmem_limit_bytes():
    # Generation-aware VMEM budget: ~100 MiB on 128 MiB parts (v5e/v6e), ~48 MiB on
    # v7x (64 MiB physical), with headroom for Mosaic internal scratch.
    try:
        cap = int(pltpu.get_tpu_info().vmem_capacity_bytes)
    except Exception:
        cap = 128 * 1024 * 1024
    return max(32 * 1024 * 1024, min(cap - 16 * 1024 * 1024, 100 * 1024 * 1024))


def transformer_block(x, params, num_heads, *, seq_tile=256, attn_tile=256, ff_tile=512):
    B, S, D = x.shape
    f32, bf16 = jnp.float32, jnp.bfloat16

    g1 = params["g1"].reshape(1, D).astype(f32)
    g2 = params["g2"].reshape(1, D).astype(f32)

    d_k = params["wq"].shape[0]
    d_v = params["wv"].shape[0]
    d_ff = params["w1"].shape[0]
    hd_k, hd_v = d_k // num_heads, d_v // num_heads

    # Fold the 1/sqrt(hd_k) softmax scale into W_Q, fuse Q/K/V into one wide RHS, and
    # pre-transpose every weight so each in-kernel dot contracts (1, 0): no per-step RHS
    # relayouts, and the w2 tile DMA is a contiguous (tf, D) row slab.
    scale = 1.0 / math.sqrt(hd_k)
    wqkv = jnp.concatenate(
        [params["wq"].astype(f32) * scale,
         params["wk"].astype(f32),
         params["wv"].astype(f32)], axis=0).T.astype(bf16)            # (D, 2*d_k + d_v)
    wo_t = params["wo"].T.astype(bf16)                                 # (d_v, D)
    w1_t = params["w1"].T.astype(bf16)                                 # (D, d_ff)
    w3_t = params["w3"].T.astype(bf16)                                 # (D, d_ff)
    w2_t = params["w2"].T.astype(bf16)                                 # (d_ff, D)

    ts = _tile(S, seq_tile, 8)
    tq = _tile(S, attn_tile, 8)        # one tile size for Q and KV (exact causal tiling)
    tf = _tile(d_ff, ff_tile, 128)

    vmem_bytes = _vmem_limit_bytes()

    def cparams(sems):
        return pltpu.CompilerParams(dimension_semantics=sems,
                                    vmem_limit_bytes=vmem_bytes)

    # ---------------- kernel 1: RMSNorm1 + fused QKV ----------------
    q, k, v = pl.pallas_call(
        rmsnorm_qkv_kernel,
        grid_spec=pltpu.PrefetchScalarGridSpec(
            num_scalar_prefetch=0,
            grid=(B, S // ts),
            in_specs=[
                pl.BlockSpec((1, ts, D), lambda b, si: (b, si, 0)),           # x
                pl.BlockSpec((1, D), lambda b, si: (0, 0)),                   # g1
                pl.BlockSpec((D, 2 * d_k + d_v), lambda b, si: (0, 0)),       # wqkv
            ],
            out_specs=[
                pl.BlockSpec((1, num_heads, ts, hd_k), lambda b, si: (b, 0, si, 0)),
                pl.BlockSpec((1, num_heads, ts, hd_k), lambda b, si: (b, 0, si, 0)),
                pl.BlockSpec((1, num_heads, ts, hd_v), lambda b, si: (b, 0, si, 0)),
            ],
        ),
        out_shape=(jax.ShapeDtypeStruct((B, num_heads, S, hd_k), bf16),
                   jax.ShapeDtypeStruct((B, num_heads, S, hd_k), bf16),
                   jax.ShapeDtypeStruct((B, num_heads, S, hd_v), bf16)),
        compiler_params=cparams(("parallel", "parallel")),
        cost_estimate=pl.CostEstimate(
            flops=int(2 * B * S * D * (2 * d_k + d_v) + 6 * B * S * D),
            transcendentals=int(B * S),
            bytes_accessed=int(4 * B * S * D + 2 * D * (2 * d_k + d_v)
                               + 2 * B * S * (2 * d_k + d_v))),
    )(x, g1, wqkv)

    # ---------------- kernel 2: flash causal attention ----------------
    n_q = S // tq
    # Lower-triangular (qi, ki) schedule: no grid steps on fully-future KV tiles.
    sched = [(qi, ki) for qi in range(n_q) for ki in range(qi + 1)]
    qi_arr = jnp.asarray([p[0] for p in sched], dtype=jnp.int32)
    ki_arr = jnp.asarray([p[1] for p in sched], dtype=jnp.int32)
    n_steps = len(sched)

    attn = pl.pallas_call(
        flash_attention_kernel,
        grid_spec=pltpu.PrefetchScalarGridSpec(
            num_scalar_prefetch=2,
            grid=(B, n_steps),
            in_specs=[
                pl.BlockSpec((1, num_heads, tq, hd_k),
                             lambda b, s, qi, ki: (b, 0, qi[s], 0)),
                pl.BlockSpec((1, num_heads, tq, hd_k),
                             lambda b, s, qi, ki: (b, 0, ki[s], 0)),
                pl.BlockSpec((1, num_heads, tq, hd_v),
                             lambda b, s, qi, ki: (b, 0, ki[s], 0)),
            ],
            out_specs=pl.BlockSpec((1, tq, d_v),
                                   lambda b, s, qi, ki: (b, qi[s], 0)),
            scratch_shapes=[
                pltpu.VMEM((num_heads, tq, 1), jnp.float32),     # running max
                pltpu.VMEM((num_heads, tq, 1), jnp.float32),     # running sum
                pltpu.VMEM((num_heads, tq, hd_v), jnp.float32),  # output accumulator
            ],
        ),
        out_shape=jax.ShapeDtypeStruct((B, S, d_v), bf16),
        compiler_params=cparams(("parallel", "arbitrary")),
        cost_estimate=pl.CostEstimate(
            flops=int(2 * B * n_steps * tq * tq * (d_k + d_v)),
            transcendentals=int(B * n_steps * num_heads * tq * tq),
            bytes_accessed=int(2 * B * S * d_k                        # Q: once per row
                               + 2 * B * n_steps * tq * (d_k + d_v)   # K/V re-reads
                               + 2 * B * S * d_v)),                   # output
    )(qi_arr, ki_arr, q, k, v)

    # ---------------- kernel 3: W_O + residual + RMSNorm2 + SwiGLU + residual ----------------
    out = pl.pallas_call(
        out_ffn_kernel,
        grid_spec=pltpu.PrefetchScalarGridSpec(
            num_scalar_prefetch=0,
            grid=(B, S // ts, d_ff // tf),
            in_specs=[
                pl.BlockSpec((1, ts, d_v), lambda b, si, kf: (b, si, 0)),   # attn
                pl.BlockSpec((1, ts, D), lambda b, si, kf: (b, si, 0)),     # x (residual)
                pl.BlockSpec((d_v, D), lambda b, si, kf: (0, 0)),           # wo^T
                pl.BlockSpec((1, D), lambda b, si, kf: (0, 0)),             # g2
                pl.BlockSpec((D, tf), lambda b, si, kf: (0, kf)),           # w1^T tile
                pl.BlockSpec((D, tf), lambda b, si, kf: (0, kf)),           # w3^T tile
                pl.BlockSpec((tf, D), lambda b, si, kf: (kf, 0)),           # w2^T tile (contiguous)
            ],
            out_specs=pl.BlockSpec((1, ts, D), lambda b, si, kf: (b, si, 0)),
            scratch_shapes=[
                pltpu.VMEM((ts, D), jnp.float32),     # y1 (residual carrier)
                pltpu.VMEM((ts, D), jnp.bfloat16),    # RMSNorm2(y1) as matmul operand
                pltpu.VMEM((ts, D), jnp.float32),     # FFN output accumulator
            ],
        ),
        out_shape=jax.ShapeDtypeStruct((B, S, D), x.dtype),
        compiler_params=cparams(("parallel", "parallel", "arbitrary")),
        cost_estimate=pl.CostEstimate(
            flops=int(2 * B * S * (D * d_v + 3 * D * d_ff) + 10 * B * S * D
                      + 4 * B * S * d_ff),
            transcendentals=int(B * S * d_ff + B * S),
            bytes_accessed=int(2 * (D * d_v + 3 * D * d_ff)
                               + B * S * (2 * d_v + 8 * D))),
    )(attn, x, wo_t, g2, w1_t, w3_t, w2_t)

    return out


# ---------------------------------------------------------------------------
# Pure-JAX reference (module semantics).  matmul_dtype=float32 is the exact
# PyTorch math; matmul_dtype=bfloat16 mirrors the kernels' precision policy
# (bf16 matmul operands, f32 accumulation, f32 softmax / RMSNorm).
# ---------------------------------------------------------------------------
def transformer_block_ref(x, params, num_heads, *, matmul_dtype=jnp.float32):
    B, S, D = x.shape
    f32 = jnp.float32
    c = lambda a: a.astype(matmul_dtype)

    def rmsnorm(v, g):
        vf = v.astype(f32)
        rms = jnp.sqrt(jnp.sum(vf * vf, axis=-1, keepdims=True) / vf.shape[-1] + EPS)
        return (vf / rms) * g

    g1 = params["g1"].astype(f32)
    g2 = params["g2"].astype(f32)
    wq, wk, wv, wo = params["wq"], params["wk"], params["wv"], params["wo"]
    w1, w2, w3 = params["w1"], params["w2"], params["w3"]
    d_k, d_v = wq.shape[0], wv.shape[0]
    hk, hv = d_k // num_heads, d_v // num_heads

    xn = rmsnorm(x, g1)
    q = jnp.einsum("bsd,ed->bse", c(xn), c(wq), preferred_element_type=f32)
    k = jnp.einsum("bsd,ed->bse", c(xn), c(wk), preferred_element_type=f32)
    v = jnp.einsum("bsd,ed->bse", c(xn), c(wv), preferred_element_type=f32)
    q = q.reshape(B, S, num_heads, hk).transpose(0, 2, 1, 3)
    k = k.reshape(B, S, num_heads, hk).transpose(0, 2, 1, 3)
    v = v.reshape(B, S, num_heads, hv).transpose(0, 2, 1, 3)

    s = jnp.einsum("bhnd,bhmd->bhnm", c(q), c(k),
                   preferred_element_type=f32) / jnp.sqrt(jnp.float32(hk))
    mask = jnp.tril(jnp.ones((S, S), dtype=bool))
    s = jnp.where(mask, s, -jnp.inf)
    p = jax.nn.softmax(s, axis=-1)
    o = jnp.einsum("bhnm,bhmd->bhnd", c(p), c(v), preferred_element_type=f32)
    o = o.transpose(0, 2, 1, 3).reshape(B, S, d_v)

    y1 = jnp.einsum("bse,de->bsd", c(o), c(wo), preferred_element_type=f32) + x
    y1n = rmsnorm(y1, g2)
    h1 = jnp.einsum("bsd,fd->bsf", c(y1n), c(w1), preferred_element_type=f32)
    h3 = jnp.einsum("bsd,fd->bsf", c(y1n), c(w3), preferred_element_type=f32)
    gated = h1 * jax.nn.sigmoid(h1) * h3
    ffn = jnp.einsum("bsf,df->bsd", c(gated), c(w2), preferred_element_type=f32)
    return (ffn + y1).astype(x.dtype)


if __name__ == "__main__":
    # Small shapes consistent with the module: batch=2, seq=16, d_model=d_in=32,
    # num_heads=4, d_k=d_v=32 (per-head dim 8), d_ff=64.
    B, S, D = 2, 16, 32
    num_heads = 4
    d_k = d_v = 32
    d_ff = 64

    key = jax.random.PRNGKey(0)
    ks = jax.random.split(key, 10)
    scale = 0.1
    # RMSNorm gains set near 1 (the reference init of zeros would zero the block out).
    params = {
        "g1": 1.0 + 0.1 * jax.random.normal(ks[8], (D,), jnp.float32),
        "g2": 1.0 + 0.1 * jax.random.normal(ks[9], (D,), jnp.float32),
        "wq": scale * jax.random.normal(ks[0], (d_k, D), jnp.float32),
        "wk": scale * jax.random.normal(ks[1], (d_k, D), jnp.float32),
        "wv": scale * jax.random.normal(ks[2], (d_v, D), jnp.float32),
        "wo": scale * jax.random.normal(ks[3], (D, d_v), jnp.float32),
        "w1": scale * jax.random.normal(ks[4], (d_ff, D), jnp.float32),
        "w2": scale * jax.random.normal(ks[5], (D, d_ff), jnp.float32),
        "w3": scale * jax.random.normal(ks[6], (d_ff, D), jnp.float32),
    }
    x = jax.random.normal(ks[7], (B, S, D), jnp.float32)

    out = transformer_block(x, params, num_heads)
    out = jax.block_until_ready(out)
    assert out.shape == (B, S, D)

    # Tight structural check against a reference using the same precision policy.
    ref_bf16 = transformer_block_ref(x, params, num_heads, matmul_dtype=jnp.bfloat16)
    assert jnp.allclose(out, ref_bf16, atol=2e-2, rtol=2e-2), \
        "mismatch vs bf16-matched reference"

    # Module-semantics (f32) check; tolerance covers bf16 matmul-operand rounding.
    ref_f32 = transformer_block_ref(x, params, num_heads, matmul_dtype=jnp.float32)
    assert jnp.allclose(out, ref_f32, atol=1e-1, rtol=1e-1), \
        "mismatch vs f32 module reference"

    print("KERNEL_OK")
</pallas_src>

<mosaic_0001>
module attributes {stable_mosaic.version = 11 : i64} {
  func.func @rmsnorm_qkv_kernel(%arg0: i32, %arg1: i32, %arg2: memref<1x16x32xf32, #tpu.memory_space<vmem>>, %arg3: memref<1x32xf32, #tpu.memory_space<vmem>>, %arg4: memref<32x96xbf16, #tpu.memory_space<vmem>>, %arg5: memref<1x4x16x8xbf16, #tpu.memory_space<vmem>>, %arg6: memref<1x4x16x8xbf16, #tpu.memory_space<vmem>>, %arg7: memref<1x4x16x8xbf16, #tpu.memory_space<vmem>>) attributes {dimension_semantics = [#tpu.dimension_semantics<parallel>, #tpu.dimension_semantics<parallel>], iteration_bounds = array<i64: 2, 1>, scalar_prefetch = 0 : i64, scratch_operands = 0 : i64, tpu.core_type = #tpu.core_type<tc>, window_params = [{transform_indices = @transform_0, window_bounds = array<i64: 1, 16, 32>}, {pipeline_mode = #tpu.pipeline_mode<synchronous>, transform_indices = @transform_1, window_bounds = array<i64: 1, 32>}, {pipeline_mode = #tpu.pipeline_mode<synchronous>, transform_indices = @transform_2, window_bounds = array<i64: 32, 96>}, {transform_indices = @transform_3, window_bounds = array<i64: 1, 4, 16, 8>}, {transform_indices = @transform_4, window_bounds = array<i64: 1, 4, 16, 8>}, {transform_indices = @transform_5, window_bounds = array<i64: 1, 4, 16, 8>}]} {
    %c0 = arith.constant 0 : index
    %c0_0 = arith.constant 0 : index
    %c0_1 = arith.constant 0 : index
    %0 = vector.load %arg2[%c0, %c0_0, %c0_1] : memref<1x16x32xf32, #tpu.memory_space<vmem>>, vector<1x16x32xf32>
    %1 = vector.shape_cast %0 : vector<1x16x32xf32> to vector<16x32xf32>
    %2 = arith.mulf %1, %1 : vector<16x32xf32>
    %cst = arith.constant dense<0.000000e+00> : vector<16xf32>
    %3 = vector.multi_reduction <add>, %2, %cst [1] : vector<16x32xf32> to vector<16xf32>
    %4 = vector.shape_cast %3 : vector<16xf32> to vector<16x1xf32>
    %cst_2 = arith.constant 3.200000e+01 : f32
    %5 = vector.broadcast %cst_2 : f32 to vector<16x1xf32>
    %6 = arith.divf %4, %5 : vector<16x1xf32>
    %cst_3 = arith.constant 9.99999974E-6 : f32
    %7 = vector.broadcast %cst_3 : f32 to vector<16x1xf32>
    %8 = arith.addf %6, %7 : vector<16x1xf32>
    %9 = math.rsqrt %8 : vector<16x1xf32>
    %10 = vector.broadcast %9 : vector<16x1xf32> to vector<16x32xf32>
    %11 = arith.mulf %1, %10 : vector<16x32xf32>
    %c0_4 = arith.constant 0 : index
    %c0_5 = arith.constant 0 : index
    %12 = vector.load %arg3[%c0_4, %c0_5] : memref<1x32xf32, #tpu.memory_space<vmem>>, vector<1x32xf32>
    %13 = vector.broadcast %12 : vector<1x32xf32> to vector<16x32xf32>
    %14 = arith.mulf %11, %13 : vector<16x32xf32>
    %15 = arith.truncf %14 : vector<16x32xf32> to vector<16x32xbf16>
    %c0_6 = arith.constant 0 : index
    %c0_7 = arith.constant 0 : index
    %16 = vector.load %arg4[%c0_6, %c0_7] : memref<32x96xbf16, #tpu.memory_space<vmem>>, vector<32x96xbf16>
    %cst_8 = arith.constant dense<0.000000e+00> : vector<16x96xf32>
    %17 = tpu.matmul %15, %16, %cst_8 {dimension_numbers = #tpu.dot_dimension_numbers<[1], [0], [0], [1], [0, 0, 1, 1], [], []>} : vector<16x32xbf16>, vector<32x96xbf16>, vector<16x96xf32> -> vector<16x96xf32>
    %18 = vector.extract_strided_slice %17 {offsets = [0, 0], sizes = [16, 8], strides = [1, 1]} : vector<16x96xf32> to vector<16x8xf32>
    %19 = arith.truncf %18 : vector<16x8xf32> to vector<16x8xbf16>
    %c0_9 = arith.constant 0 : index
    %c0_10 = arith.constant 0 : index
    %c0_11 = arith.constant 0 : index
    %c0_12 = arith.constant 0 : index
    %20 = vector.load %arg5[%c0_9, %c0_10, %c0_11, %c0_12] : memref<1x4x16x8xbf16, #tpu.memory_space<vmem>>, vector<1x1x16x8xbf16>
    %21 = vector.shape_cast %20 : vector<1x1x16x8xbf16> to vector<16x8xbf16>
    %22 = vector.shape_cast %19 : vector<16x8xbf16> to vector<1x1x16x8xbf16>
    tpu.vector_store %arg5[%c0_9, %c0_10, %c0_11, %c0_12], %22 {strides = array<i32>} : memref<1x4x16x8xbf16, #tpu.memory_space<vmem>>, vector<1x1x16x8xbf16>,
    %23 = vector.extract_strided_slice %17 {offsets = [0, 32], sizes = [16, 8], strides = [1, 1]} : vector<16x96xf32> to vector<16x8xf32>
    %24 = arith.truncf %23 : vector<16x8xf32> to vector<16x8xbf16>
    %c0_13 = arith.constant 0 : index
    %c0_14 = arith.constant 0 : index
    %c0_15 = arith.constant 0 : index
    %c0_16 = arith.constant 0 : index
    %25 = vector.load %arg6[%c0_13, %c0_14, %c0_15, %c0_16] : memref<1x4x16x8xbf16, #tpu.memory_space<vmem>>, vector<1x1x16x8xbf16>
    %26 = vector.shape_cast %25 : vector<1x1x16x8xbf16> to vector<16x8xbf16>
    %27 = vector.shape_cast %24 : vector<16x8xbf16> to vector<1x1x16x8xbf16>
    tpu.vector_store %arg6[%c0_13, %c0_14, %c0_15, %c0_16], %27 {strides = array<i32>} : memref<1x4x16x8xbf16, #tpu.memory_space<vmem>>, vector<1x1x16x8xbf16>,
    %28 = vector.extract_strided_slice %17 {offsets = [0, 64], sizes = [16, 8], strides = [1, 1]} : vector<16x96xf32> to vector<16x8xf32>
    %29 = arith.truncf %28 : vector<16x8xf32> to vector<16x8xbf16>
    %c0_17 = arith.constant 0 : index
    %c0_18 = arith.constant 0 : index
    %c0_19 = arith.constant 0 : index
    %c0_20 = arith.constant 0 : index
    %30 = vector.load %arg7[%c0_17, %c0_18, %c0_19, %c0_20] : memref<1x4x16x8xbf16, #tpu.memory_space<vmem>>, vector<1x1x16x8xbf16>
    %31 = vector.shape_cast %30 : vector<1x1x16x8xbf16> to vector<16x8xbf16>
    %32 = vector.shape_cast %29 : vector<16x8xbf16> to vector<1x1x16x8xbf16>
    tpu.vector_store %arg7[%c0_17, %c0_18, %c0_19, %c0_20], %32 {strides = array<i32>} : memref<1x4x16x8xbf16, #tpu.memory_space<vmem>>, vector<1x1x16x8xbf16>,
    %33 = vector.extract_strided_slice %17 {offsets = [0, 8], sizes = [16, 8], strides = [1, 1]} : vector<16x96xf32> to vector<16x8xf32>
    %34 = arith.truncf %33 : vector<16x8xf32> to vector<16x8xbf16>
    %c0_21 = arith.constant 0 : index
    %c1 = arith.constant 1 : index
    %c0_22 = arith.constant 0 : index
    %c0_23 = arith.constant 0 : index
    %35 = vector.load %arg5[%c0_21, %c1, %c0_22, %c0_23] : memref<1x4x16x8xbf16, #tpu.memory_space<vmem>>, vector<1x1x16x8xbf16>
    %36 = vector.shape_cast %35 : vector<1x1x16x8xbf16> to vector<16x8xbf16>
    %37 = vector.shape_cast %34 : vector<16x8xbf16> to vector<1x1x16x8xbf16>
    tpu.vector_store %arg5[%c0_21, %c1, %c0_22, %c0_23], %37 {strides = array<i32>} : memref<1x4x16x8xbf16, #tpu.memory_space<vmem>>, vector<1x1x16x8xbf16>,
    %38 = vector.extract_strided_slice %17 {offsets = [0, 40], sizes = [16, 8], strides = [1, 1]} : vector<16x96xf32> to vector<16x8xf32>
    %39 = arith.truncf %38 : vector<16x8xf32> to vector<16x8xbf16>
    %c0_24 = arith.constant 0 : index
    %c1_25 = arith.constant 1 : index
    %c0_26 = arith.constant 0 : index
    %c0_27 = arith.constant 0 : index
    %40 = vector.load %arg6[%c0_24, %c1_25, %c0_26, %c0_27] : memref<1x4x16x8xbf16, #tpu.memory_space<vmem>>, vector<1x1x16x8xbf16>
    %41 = vector.shape_cast %40 : vector<1x1x16x8xbf16> to vector<16x8xbf16>
    %42 = vector.shape_cast %39 : vector<16x8xbf16> to vector<1x1x16x8xbf16>
    tpu.vector_store %arg6[%c0_24, %c1_25, %c0_26, %c0_27], %42 {strides = array<i32>} : memref<1x4x16x8xbf16, #tpu.memory_space<vmem>>, vector<1x1x16x8xbf16>,
    %43 = vector.extract_strided_slice %17 {offsets = [0, 72], sizes = [16, 8], strides = [1, 1]} : vector<16x96xf32> to vector<16x8xf32>
    %44 = arith.truncf %43 : vector<16x8xf32> to vector<16x8xbf16>
    %c0_28 = arith.constant 0 : index
    %c1_29 = arith.constant 1 : index
    %c0_30 = arith.constant 0 : index
    %c0_31 = arith.constant 0 : index
    %45 = vector.load %arg7[%c0_28, %c1_29, %c0_30, %c0_31] : memref<1x4x16x8xbf16, #tpu.memory_space<vmem>>, vector<1x1x16x8xbf16>
    %46 = vector.shape_cast %45 : vector<1x1x16x8xbf16> to vector<16x8xbf16>
    %47 = vector.shape_cast %44 : vector<16x8xbf16> to vector<1x1x16x8xbf16>
    tpu.vector_store %arg7[%c0_28, %c1_29, %c0_30, %c0_31], %47 {strides = array<i32>} : memref<1x4x16x8xbf16, #tpu.memory_space<vmem>>, vector<1x1x16x8xbf16>,
    %48 = vector.extract_strided_slice %17 {offsets = [0, 16], sizes = [16, 8], strides = [1, 1]} : vector<16x96xf32> to vector<16x8xf32>
    %49 = arith.truncf %48 : vector<16x8xf32> to vector<16x8xbf16>
    %c0_32 = arith.constant 0 : index
    %c2 = arith.constant 2 : index
    %c0_33 = arith.constant 0 : index
    %c0_34 = arith.constant 0 : index
    %50 = vector.load %arg5[%c0_32, %c2, %c0_33, %c0_34] : memref<1x4x16x8xbf16, #tpu.memory_space<vmem>>, vector<1x1x16x8xbf16>
    %51 = vector.shape_cast %50 : vector<1x1x16x8xbf16> to vector<16x8xbf16>
    %52 = vector.shape_cast %49 : vector<16x8xbf16> to vector<1x1x16x8xbf16>
    tpu.vector_store %arg5[%c0_32, %c2, %c0_33, %c0_34], %52 {strides = array<i32>} : memref<1x4x16x8xbf16, #tpu.memory_space<vmem>>, vector<1x1x16x8xbf16>,
    %53 = vector.extract_strided_slice %17 {offsets = [0, 48], sizes = [16, 8], strides = [1, 1]} : vector<16x96xf32> to vector<16x8xf32>
    %54 = arith.truncf %53 : vector<16x8xf32> to vector<16x8xbf16>
    %c0_35 = arith.constant 0 : index
    %c2_36 = arith.constant 2 : index
    %c0_37 = arith.constant 0 : index
    %c0_38 = arith.constant 0 : index
    %55 = vector.load %arg6[%c0_35, %c2_36, %c0_37, %c0_38] : memref<1x4x16x8xbf16, #tpu.memory_space<vmem>>, vector<1x1x16x8xbf16>
    %56 = vector.shape_cast %55 : vector<1x1x16x8xbf16> to vector<16x8xbf16>
    %57 = vector.shape_cast %54 : vector<16x8xbf16> to vector<1x1x16x8xbf16>
    tpu.vector_store %arg6[%c0_35, %c2_36, %c0_37, %c0_38], %57 {strides = array<i32>} : memref<1x4x16x8xbf16, #tpu.memory_space<vmem>>, vector<1x1x16x8xbf16>,
    %58 = vector.extract_strided_slice %17 {offsets = [0, 80], sizes = [16, 8], strides = [1, 1]} : vector<16x96xf32> to vector<16x8xf32>
    %59 = arith.truncf %58 : vector<16x8xf32> to vector<16x8xbf16>
    %c0_39 = arith.constant 0 : index
    %c2_40 = arith.constant 2 : index
    %c0_41 = arith.constant 0 : index
    %c0_42 = arith.constant 0 : index
    %60 = vector.load %arg7[%c0_39, %c2_40, %c0_41, %c0_42] : memref<1x4x16x8xbf16, #tpu.memory_space<vmem>>, vector<1x1x16x8xbf16>
    %61 = vector.shape_cast %60 : vector<1x1x16x8xbf16> to vector<16x8xbf16>
    %62 = vector.shape_cast %59 : vector<16x8xbf16> to vector<1x1x16x8xbf16>
    tpu.vector_store %arg7[%c0_39, %c2_40, %c0_41, %c0_42], %62 {strides = array<i32>} : memref<1x4x16x8xbf16, #tpu.memory_space<vmem>>, vector<1x1x16x8xbf16>,
    %63 = vector.extract_strided_slice %17 {offsets = [0, 24], sizes = [16, 8], strides = [1, 1]} : vector<16x96xf32> to vector<16x8xf32>
    %64 = arith.truncf %63 : vector<16x8xf32> to vector<16x8xbf16>
    %c0_43 = arith.constant 0 : index
    %c3 = arith.constant 3 : index
    %c0_44 = arith.constant 0 : index
    %c0_45 = arith.constant 0 : index
    %65 = vector.load %arg5[%c0_43, %c3, %c0_44, %c0_45] : memref<1x4x16x8xbf16, #tpu.memory_space<vmem>>, vector<1x1x16x8xbf16>
    %66 = vector.shape_cast %65 : vector<1x1x16x8xbf16> to vector<16x8xbf16>
    %67 = vector.shape_cast %64 : vector<16x8xbf16> to vector<1x1x16x8xbf16>
    tpu.vector_store %arg5[%c0_43, %c3, %c0_44, %c0_45], %67 {strides = array<i32>} : memref<1x4x16x8xbf16, #tpu.memory_space<vmem>>, vector<1x1x16x8xbf16>,
    %68 = vector.extract_strided_slice %17 {offsets = [0, 56], sizes = [16, 8], strides = [1, 1]} : vector<16x96xf32> to vector<16x8xf32>
    %69 = arith.truncf %68 : vector<16x8xf32> to vector<16x8xbf16>
    %c0_46 = arith.constant 0 : index
    %c3_47 = arith.constant 3 : index
    %c0_48 = arith.constant 0 : index
    %c0_49 = arith.constant 0 : index
    %70 = vector.load %arg6[%c0_46, %c3_47, %c0_48, %c0_49] : memref<1x4x16x8xbf16, #tpu.memory_space<vmem>>, vector<1x1x16x8xbf16>
    %71 = vector.shape_cast %70 : vector<1x1x16x8xbf16> to vector<16x8xbf16>
    %72 = vector.shape_cast %69 : vector<16x8xbf16> to vector<1x1x16x8xbf16>
    tpu.vector_store %arg6[%c0_46, %c3_47, %c0_48, %c0_49], %72 {strides = array<i32>} : memref<1x4x16x8xbf16, #tpu.memory_space<vmem>>, vector<1x1x16x8xbf16>,
    %73 = vector.extract_strided_slice %17 {offsets = [0, 88], sizes = [16, 8], strides = [1, 1]} : vector<16x96xf32> to vector<16x8xf32>
    %74 = arith.truncf %73 : vector<16x8xf32> to vector<16x8xbf16>
    %c0_50 = arith.constant 0 : index
    %c3_51 = arith.constant 3 : index
    %c0_52 = arith.constant 0 : index
    %c0_53 = arith.constant 0 : index
    %75 = vector.load %arg7[%c0_50, %c3_51, %c0_52, %c0_53] : memref<1x4x16x8xbf16, #tpu.memory_space<vmem>>, vector<1x1x16x8xbf16>
    %76 = vector.shape_cast %75 : vector<1x1x16x8xbf16> to vector<16x8xbf16>
    %77 = vector.shape_cast %74 : vector<16x8xbf16> to vector<1x1x16x8xbf16>
    tpu.vector_store %arg7[%c0_50, %c3_51, %c0_52, %c0_53], %77 {strides = array<i32>} : memref<1x4x16x8xbf16, #tpu.memory_space<vmem>>, vector<1x1x16x8xbf16>,
    return
  }
  func.func @transform_0(%arg0: i32, %arg1: i32) -> (i32, i32, i32) {
    %c0_i32 = arith.constant 0 : i32
    %c0_i32_0 = arith.constant 0 : i32
    return %arg0, %arg1, %c0_i32 : i32, i32, i32
  }
  func.func @transform_1(%arg0: i32, %arg1: i32) -> (i32, i32) {
    %c0_i32 = arith.constant 0 : i32
    %c0_i32_0 = arith.constant 0 : i32
    %c0_i32_1 = arith.constant 0 : i32
    return %c0_i32, %c0_i32_0 : i32, i32
  }
  func.func @transform_2(%arg0: i32, %arg1: i32) -> (i32, i32) {
    %c0_i32 = arith.constant 0 : i32
    %c0_i32_0 = arith.constant 0 : i32
    %c0_i32_1 = arith.constant 0 : i32
    return %c0_i32, %c0_i32_0 : i32, i32
  }
  func.func @transform_3(%arg0: i32, %arg1: i32) -> (i32, i32, i32, i32) {
    %c0_i32 = arith.constant 0 : i32
    %c0_i32_0 = arith.constant 0 : i32
    %c0_i32_1 = arith.constant 0 : i32
    return %arg0, %c0_i32, %arg1, %c0_i32_0 : i32, i32, i32, i32
  }
  func.func @transform_4(%arg0: i32, %arg1: i32) -> (i32, i32, i32, i32) {
    %c0_i32 = arith.constant 0 : i32
    %c0_i32_0 = arith.constant 0 : i32
    %c0_i32_1 = arith.constant 0 : i32
    return %arg0, %c0_i32, %arg1, %c0_i32_0 : i32, i32, i32, i32
  }
  func.func @transform_5(%arg0: i32, %arg1: i32) -> (i32, i32, i32, i32) {
    %c0_i32 = arith.constant 0 : i32
    %c0_i32_0 = arith.constant 0 : i32
    %c0_i32_1 = arith.constant 0 : i32
    return %arg0, %c0_i32, %arg1, %c0_i32_0 : i32, i32, i32, i32
  }
}

</mosaic_0001>

<llo_original>
// kernel: tpu_custom_call.1
$region0: #{tpu_custom_call.1}
  #allocation0 [shape = 'u32[]', space=smem, size = 0x4, offset = 0x4, fixed_abs, tag = 'smem constant byte address 0x4 - core index']
  #allocation1 [shape = 'u32[144,128]{1,0:T(1,128)}', space=vmem, size = 0x12000, scoped, tag = 'internal scratch']
  %s0 = inlined_call_operand.hbm [shape: f32[2,16,32], index: 0, kind: input, shape index: {}]
  %s1 = inlined_call_operand.hbm [shape: f32[1,32], index: 1, kind: input, shape index: {}]
  %s2 = inlined_call_operand.hbm [shape: bf16[32,96], index: 2, kind: input, shape index: {}]
  %s3 = inlined_call_operand.hbm [shape: bf16[2,4,16,8], index: 3, kind: output, shape index: {0}]
  %s4 = inlined_call_operand.hbm [shape: bf16[2,4,16,8], index: 4, kind: output, shape index: {1}]
  %s5 = inlined_call_operand.hbm [shape: bf16[2,4,16,8], index: 5, kind: output, shape index: {2}]
  %6 = xla_tuple %s3, %s4, %s5
  %s7 = sld [smem:[#allocation0]]
  $region73: #{tpu_custom_call.1} parent=0
    _
  %s9 = ssub.s32 1, %s7
  %s10 = scalar_select 0, %s9, %s7
  $region1: #{tpu_custom_call.1} parent=0
    #allocation2 [shape = 'u8[16384]{0}', space=vmem, size = 0x4000, scoped, tag = 'input window, operand 0']
    #allocation3 [shape = 's32[2]{0}', space=sflag, size = 0x8, scoped, tag = 'scoped memory for tpu_custom_call.1']
    #allocation4 [shape = 's32[2]{0}', space=sflag, size = 0x8, scoped, tag = 'scoped memory for tpu_custom_call.1']
    #allocation5 [shape = 'u8[512]{0}', space=vmem, size = 0x400, scoped, tag = 'input window, operand 1, single buffered']
    #allocation6 [shape = 's32[1]{0}', space=sflag, size = 0x4, scoped, tag = 'scoped memory for tpu_custom_call.1']
    #allocation7 [shape = 'u8[8192]{0}', space=vmem, size = 0x2000, scoped, tag = 'input window, operand 2, single buffered']
    #allocation8 [shape = 'u8[32768]{0}', space=vmem, size = 0x8000, scoped, tag = 'output window, operand 0']
    #allocation9 [shape = 'u8[32768]{0}', space=vmem, size = 0x8000, scoped, tag = 'output window, operand 1']
    #allocation10 [shape = 's32[2]{0}', space=sflag, size = 0x8, scoped, tag = 'scoped memory for tpu_custom_call.1']
    #allocation11 [shape = 'u8[32768]{0}', space=vmem, size = 0x8000, scoped, tag = 'output window, operand 2']
    %11 = vsyncpa [#allocation3], 0
    %s12 = scalar_lea.sflag [#allocation3], 1
    %13 = vsyncpa %s12, 0
    %14 = vsyncpa [#allocation6], 0
    %15 = vsyncpa [#allocation4], 0
    %s16 = scalar_lea.sflag [#allocation4], 1
    %17 = vsyncpa %s16, 0
    %18 = vsyncpa [#allocation10], 0
    %s19 = scalar_lea.sflag [#allocation10], 1
    %20 = vsyncpa %s19, 0
    loop: start=0, step=1, limit=4
    $region2: #{tpu_custom_call.1} parent=1 // loop_pre_header
      _
    $region3: #{tpu_custom_call.1} parent=1 // loop_header
      %s22 = sphi 0, %s26
      %p23 = scmp.ge.s32.totalorder %s22, 4
      %s29 = sphi 0, %s41
      %s30 = sphi 0, %s37
      %s31 = sphi 0, %s29
      %s32 = sphi 0, %s30
      %s33 = sphi 0, %s31
      %s34 = sphi 0, %s32
      %s46 = sphi 0, %s48
      %s49 = sphi 0, %s46
      %s50 = sphi 0, %s49
      %s66 = sphi 0, %s50
      %s70 = sphi 0, %s70
      %s72 = sphi 0, %s70
      %s73 = sphi 0, %s72
      %s87 = sphi 0, %s73
      %s91 = sphi 0, %s91
      %s93 = sphi 0, %s91
      %s94 = sphi 0, %s93
      %s108 = sphi 0, %s94
      %s116 = sphi 0, %s118
      %s119 = sphi 0, %s116
      %s120 = sphi 0, %s119
      %s136 = sphi 0, %s120
      %s144 = sphi 0, %s146
      %s147 = sphi 0, %s144
      %s148 = sphi 0, %s147
      %s164 = sphi 0, %s148
      %s172 = sphi 0, %s174
      %s175 = sphi 0, %s172
      %s176 = sphi 0, %s175
      %s192 = sphi 0, %s176
    $region4: #{tpu_custom_call.1} parent=1 // loop_header_branch
      %25 = sbr.rel (%p23) target = $region8
    $region5: #{tpu_custom_call.1} parent=1 // loop_body
      %s27 = ssub.s32 %s22, 1
      %s28 = ssub.s32 %s22, 2
      %s35 = sadd.s32 1, %s30
      %p36 = scmp.ge.s32.totalorder %s35, 1
      %s37 = scalar_select %p36, 0, %s35
      %s38 = sadd.s32 1, %s29
      %s39 = scalar_select %p36, %s38, %s29
      %p40 = scmp.ge.s32.totalorder %s39, 2
      %s41 = scalar_select %p40, 0, %s39
      %s42 = ssub.s32 %s29, %s41
      %s43 = ssub.s32 %s30, %s37
      %s44 = sor.u32 %s42, %s43
      %p45 = scmp.eq.s32.totalorder %s44, 0
      %s47 = sadd.s32 %s46, 1
      %s48 = scalar_select %p45, %s46, %s47
      %p51 = pneg %p45
      %p52 = scmp.eq.s32.totalorder %s22, 1
      %p53 = por %p51, %p52
      %p54 = scmp.ne.s32.totalorder %s46, %s49
      %p55 = scmp.eq.s32.totalorder %s22, 0
      %p56 = por %p54, %p55
      %p57 = scmp.ne.s32.totalorder %s46, %s49
      %p58 = scmp.eq.s32.totalorder %s27, 1
      %p59 = por %p57, %p58
      %p60 = scmp.ne.s32.totalorder %s49, %s50
      %p61 = scmp.eq.s32.totalorder %s27, 0
      %p62 = por %p60, %p61
      %p63 = scmp.ne.s32.totalorder %s49, %s50
      %p64 = scmp.eq.s32.totalorder %s28, 1
      %p65 = por %p63, %p64
      %p67 = scmp.ne.s32.totalorder %s50, %s66
      %p68 = scmp.eq.s32.totalorder %s28, 0
      %p69 = por %p67, %p68
      %s71 = sadd.s32 %s70, 1
      %p74 = scmp.eq.s32.totalorder %s22, 1
      %p75 = scmp.ne.s32.totalorder %s70, %s72
      %p76 = scmp.eq.s32.totalorder %s22, 0
      %p77 = por %p75, %p76
      %p78 = scmp.ne.s32.totalorder %s70, %s72
      %p79 = scmp.eq.s32.totalorder %s27, 1
      %p80 = por %p78, %p79
      %p81 = scmp.ne.s32.totalorder %s72, %s73
      %p82 = scmp.eq.s32.totalorder %s27, 0
      %p83 = por %p81, %p82
      %p84 = scmp.ne.s32.totalorder %s72, %s73
      %p85 = scmp.eq.s32.totalorder %s28, 1
      %p86 = por %p84, %p85
      %p88 = scmp.ne.s32.totalorder %s73, %s87
      %p89 = scmp.eq.s32.totalorder %s28, 0
      %p90 = por %p88, %p89
      %s92 = sadd.s32 %s91, 1
      %p95 = scmp.eq.s32.totalorder %s22, 1
      %p96 = scmp.ne.s32.totalorder %s91, %s93
      %p97 = scmp.eq.s32.totalorder %s22, 0
      %p98 = por %p96, %p97
      %p99 = scmp.ne.s32.totalorder %s91, %s93
      %p100 = scmp.eq.s32.totalorder %s27, 1
      %p101 = por %p99, %p100
      %p102 = scmp.ne.s32.totalorder %s93, %s94
      %p103 = scmp.eq.s32.totalorder %s27, 0
      %p104 = por %p102, %p103
      %p105 = scmp.ne.s32.totalorder %s93, %s94
      %p106 = scmp.eq.s32.totalorder %s28, 1
      %p107 = por %p105, %p106
      %p109 = scmp.ne.s32.totalorder %s94, %s108
      %p110 = scmp.eq.s32.totalorder %s28, 0
      %p111 = por %p109, %p110
      %s112 = ssub.s32 %s29, %s41
      %s113 = ssub.s32 %s30, %s37
      %s114 = sor.u32 %s112, %s113
      %p115 = scmp.eq.s32.totalorder %s114, 0
      %s117 = sadd.s32 %s116, 1
      %s118 = scalar_select %p115, %s116, %s117
      %p121 = pneg %p115
      %p122 = scmp.eq.s32.totalorder %s22, 1
      %p123 = por %p121, %p122
      %p124 = scmp.ne.s32.totalorder %s116, %s119
      %p125 = scmp.eq.s32.totalorder %s22, 0
      %p126 = por %p124, %p125
      %p127 = scmp.ne.s32.totalorder %s116, %s119
      %p128 = scmp.eq.s32.totalorder %s27, 1
      %p129 = por %p127, %p128
      %p130 = scmp.ne.s32.totalorder %s119, %s120
      %p131 = scmp.eq.s32.totalorder %s27, 0
      %p132 = por %p130, %p131
      %p133 = scmp.ne.s32.totalorder %s119, %s120
      %p134 = scmp.eq.s32.totalorder %s28, 1
      %p135 = por %p133, %p134
      %p137 = scmp.ne.s32.totalorder %s120, %s136
      %p138 = scmp.eq.s32.totalorder %s28, 0
      %p139 = por %p137, %p138
      %s140 = ssub.s32 %s29, %s41
      %s141 = ssub.s32 %s30, %s37
      %s142 = sor.u32 %s140, %s141
      %p143 = scmp.eq.s32.totalorder %s142, 0
      %s145 = sadd.s32 %s144, 1
      %s146 = scalar_select %p143, %s144, %s145
      %p149 = pneg %p143
      %p150 = scmp.eq.s32.totalorder %s22, 1
      %p151 = por %p149, %p150
      %p152 = scmp.ne.s32.totalorder %s144, %s147
      %p153 = scmp.eq.s32.totalorder %s22, 0
      %p154 = por %p152, %p153
      %p155 = scmp.ne.s32.totalorder %s144, %s147
      %p156 = scmp.eq.s32.totalorder %s27, 1
      %p157 = por %p155, %p156
      %p158 = scmp.ne.s32.totalorder %s147, %s148
      %p159 = scmp.eq.s32.totalorder %s27, 0
      %p160 = por %p158, %p159
      %p161 = scmp.ne.s32.totalorder %s147, %s148
      %p162 = scmp.eq.s32.totalorder %s28, 1
      %p163 = por %p161, %p162
      %p165 = scmp.ne.s32.totalorder %s148, %s164
      %p166 = scmp.eq.s32.totalorder %s28, 0
      %p167 = por %p165, %p166
      %s168 = ssub.s32 %s29, %s41
      %s169 = ssub.s32 %s30, %s37
      %s170 = sor.u32 %s168, %s169
      %p171 = scmp.eq.s32.totalorder %s170, 0
      %s173 = sadd.s32 %s172, 1
      %s174 = scalar_select %p171, %s172, %s173
      %p177 = pneg %p171
      %p178 = scmp.eq.s32.totalorder %s22, 1
      %p179 = por %p177, %p178
      %p180 = scmp.ne.s32.totalorder %s172, %s175
      %p181 = scmp.eq.s32.totalorder %s22, 0
      %p182 = por %p180, %p181
      %p183 = scmp.ne.s32.totalorder %s172, %s175
      %p184 = scmp.eq.s32.totalorder %s27, 1
      %p185 = por %p183, %p184
      %p186 = scmp.ne.s32.totalorder %s175, %s176
      %p187 = scmp.eq.s32.totalorder %s27, 0
      %p188 = por %p186, %p187
      %p189 = scmp.ne.s32.totalorder %s175, %s176
      %p190 = scmp.eq.s32.totalorder %s28, 1
      %p191 = por %p189, %p190
      %p193 = scmp.ne.s32.totalorder %s176, %s192
      %p194 = scmp.eq.s32.totalorder %s28, 0
      %p195 = por %p193, %p194
      %p196 = scmp.le.s32.totalorder 1, %s22
      %p197 = scmp.lt.s32.totalorder %s22, 3
      %p198 = pnand %p196, %p197
      %p199 = pneg %p198
      // Predicated region
      $region9: #{tpu_custom_call.1} parent=5 // pred_check
        _
      $region10: #{tpu_custom_call.1} parent=5 // pred_check_branch
        %201 = sbr.rel (%p198) target = $region12
      $region11: #{tpu_custom_call.1} parent=5 // pred_region
        %s202 = ssub.s32 %s22, 1
        // Predicated region
        $region13: #{tpu_custom_call.1} parent=11 // pred_check
          %p203 = pneg %p83
        $region14: #{tpu_custom_call.1} parent=11 // pred_check_branch
          %205 = sbr.rel (%p203) target = $region16
        $region15: #{tpu_custom_call.1} parent=11 // pred_region
          %s207 = ssub.s32 16, 16
          %208 = vsyncadd [#allocation6], %s207
          %s210 = sshll.u32 [#allocation5], 4
          %s211 = int_to_ptr.vmem [resolvable:$true] %s210
          %213 = dma.hbm_to_vmem [thread:$0]  %s1, 16, %s211, [#allocation6]
        $region16: #{tpu_custom_call.1} parent=11 // pred_fallthru
          _
        // Predicated region
        $region17: #{tpu_custom_call.1} parent=11 // pred_check
          %p214 = pneg %p104
        $region18: #{tpu_custom_call.1} parent=11 // pred_check_branch
          %216 = sbr.rel (%p214) target = $region20
        $region19: #{tpu_custom_call.1} parent=11 // pred_region
          %s218 = ssub.s32 256, 256
          %219 = vsyncadd [#allocation6], %s218
          %s220 = sshll.u32 [#allocation7], 4
          %s221 = int_to_ptr.vmem [resolvable:$true] %s220
          %226 = dma.hbm_to_vmem [thread:$0]  %s2, 256, %s221, [#allocation6], 64, 64, 4
        $region20: #{tpu_custom_call.1} parent=11 // pred_fallthru
          _
      $region12: #{tpu_custom_call.1} parent=5 // pred_fallthru
        _
      %p227 = scmp.lt.s32.totalorder %s22, 2
      // Predicated region
      $region21: #{tpu_custom_call.1} parent=5 // pred_check
        %p228 = pneg %p227
      $region22: #{tpu_custom_call.1} parent=5 // pred_check_branch
        %230 = sbr.rel (%p228) target = $region24
      $region23: #{tpu_custom_call.1} parent=5 // pred_region
        // Predicated region
        $region25: #{tpu_custom_call.1} parent=23 // pred_check
          %p231 = pneg %p56
        $region26: #{tpu_custom_call.1} parent=23 // pred_check_branch
          %233 = sbr.rel (%p231) target = $region28
        $region27: #{tpu_custom_call.1} parent=23 // pred_region
          %s234 = sand.u32 %s46, 1
          %s235 = scalar_lea.sflag [#allocation3], %s234
          %s236 = sand.u32 %s46, 1
          %s237 = smul.addr %s236, 16
          %s238 = scalar_lea.vmem [#allocation2], %s237
          %s239 = smul.u32 2, %s30
          %s241 = ssub.s32 256, 256
          %242 = vsyncadd %s235, %s241
          %s243 = smul.addr %s29, 2
          %s244 = sadd.s32 %s239, %s243
          %s245 = smul.addr %s244, 128
          %s246 = scalar_lea.hbm %s0, %s245
          %s247 = sshll.u32 %s238, 4
          %s248 = int_to_ptr.vmem [resolvable:$true] %s247
          %253 = dma.hbm_to_vmem [thread:$0]  %s246, 256, %s248, %s235, 128, 128, 8
        $region28: #{tpu_custom_call.1} parent=23 // pred_fallthru
          _
      $region24: #{tpu_custom_call.1} parent=5 // pred_fallthru
        _
      %p254 = scmp.le.s32.totalorder 1, %s22
      %p255 = scmp.lt.s32.totalorder %s22, 3
      %p256 = pnand %p254, %p255
      %p257 = pneg %p256
      // Predicated region
      $region29: #{tpu_custom_call.1} parent=5 // pred_check
        _
      $region30: #{tpu_custom_call.1} parent=5 // pred_check_branch
        %259 = sbr.rel (%p256) target = $region32
      $region31: #{tpu_custom_call.1} parent=5 // pred_region
        %s260 = ssub.s32 %s22, 1
        %s261 = sand.u32 %s49, 1
        %s262 = scalar_lea.sflag [#allocation3], %s261
        %s263 = sand.u32 %s49, 1
        %s264 = smul.addr %s263, 16
        %s265 = scalar_lea.vmem [#allocation2], %s264
        // Predicated region
        $region33: #{tpu_custom_call.1} parent=31 // pred_check
          %p266 = pneg %p62
        $region34: #{tpu_custom_call.1} parent=31 // pred_check_branch
          %268 = sbr.rel (%p266) target = $region36
        $region35: #{tpu_custom_call.1} parent=31 // pred_region
          %269 = dma.done %s262, 256
        $region36: #{tpu_custom_call.1} parent=31 // pred_fallthru
          _
        // Predicated region
        $region37: #{tpu_custom_call.1} parent=31 // pred_check
          %p270 = pneg %p83
        $region38: #{tpu_custom_call.1} parent=31 // pred_check_branch
          %272 = sbr.rel (%p270) target = $region40
        $region39: #{tpu_custom_call.1} parent=31 // pred_region
          %273 = dma.done [#allocation6], 16
        $region40: #{tpu_custom_call.1} parent=31 // pred_fallthru
          _
        // Predicated region
        $region41: #{tpu_custom_call.1} parent=31 // pred_check
          %p274 = pneg %p104
        $region42: #{tpu_custom_call.1} parent=31 // pred_check_branch
          %276 = sbr.rel (%p274) target = $region44
        $region43: #{tpu_custom_call.1} parent=31 // pred_region
          %277 = dma.done [#allocation6], 256
        $region44: #{tpu_custom_call.1} parent=31 // pred_fallthru
          _
        %s278 = sand.u32 %s49, 1
        %s279 = scalar_lea.sflag [#allocation3], %s278
        %s280 = sand.u32 %s49, 1
        %s281 = smul.addr %s280, 16
        %s282 = scalar_lea.vmem [#allocation2], %s281
        %p283 = pneg %p62
        %p284 = pneg %p59
        %p285 = pneg %p83
        %p286 = pneg %p80
        %p287 = pneg %p104
        %p288 = pneg %p101
        %p289 = pneg %p132
        %p290 = pneg %p129
        %s291 = sand.u32 %s119, 1
        %s292 = scalar_lea.sflag [#allocation4], %s291
        %s293 = sand.u32 %s119, 1
        %s294 = smul.addr %s293, 32
        %s295 = scalar_lea.vmem [#allocation8], %s294
        %p296 = pneg %p160
        %p297 = pneg %p157
        %s298 = sand.u32 %s27, 1
        %s299 = scalar_lea.sflag [#allocation10], %s298
        %s300 = sand.u32 %s147, 1
        %s301 = smul.addr %s300, 32
        %s302 = scalar_lea.vmem [#allocation9], %s301
        %p303 = pneg %p188
        %p304 = pneg %p185
        %s305 = sand.u32 %s27, 1
        %s306 = scalar_lea.sflag [#allocation10], %s305
        %s307 = sand.u32 %s175, 1
        %s308 = smul.addr %s307, 32
        %s309 = scalar_lea.vmem [#allocation11], %s308
        %s310 = smul.u32 2, %s32
        %s311 = smul.u32 2, %s32
        %s312 = smul.u32 2, %s32
        %s313 = smul.u32 2, %s32
        %v315 = vld [vmem:[%s265] sm:$0xff]
        %v316 = vld [vmem:[%s265 + $0x8] sm:$0xff]
        %v317 = vmul.f32 %v315, %v315
        %v318 = vmul.f32 %v316, %v316
        %vm319 = vcmask 261120
        %v320 = vsel %vm319, %v317, 0.0
        %321 = vadd.xlane.f32.xlu0 %v320
        %v322 = vpop.xlane.xlu0 %321
        %v323 = vsel %vm319, %v318, 0.0
        %324 = vadd.xlane.f32.xlu0 %v323
        %v325 = vpop.xlane.xlu0 %324
        %v326 = vrcp.pop 32.0
        %v327 = vmul.f32 %v322, %v326
        %v328 = vmul.f32 %v325, %v326
        %v329 = vadd.f32 %v327, 1e-05
        %v330 = vadd.f32 %v328, 1e-05
        %v331 = vrsqrt.pop %v329
        %v332 = vrsqrt.pop %v330
        %v333 = vmul.f32 %v315, %v331
        %v334 = vmul.f32 %v316, %v332
        %v335 = vld [vmem:[#allocation5] sm:$0x1]
        %v337 = vlaneseq
        %v338 = vshrl.u32 %v337, 7
        %v339 = vsub.s32 0, %v338
        %v340 = vrot.slane %v335, %v339
        %v342 = vmul.f32 %v333, %v340
        %v343 = vmul.f32 %v334, %v340
        %v344 = vpack.c.bf16 %v343, %v342
        %v345 = vld [vmem:[#allocation7] sm:$0xf]
        %v346 = vld [vmem:[#allocation7 + $0x4] sm:$0xf]
        %v347 = vld [vmem:[#allocation7 + $0x8] sm:$0xf]
        %v348 = vld [vmem:[#allocation7 + $0xc] sm:$0xf]
        %v353 = vunpack.c.l.b16 %v345
        %v354 = vunpack.c.l.b16 %v346
        %v355 = vunpack.c.l.b16 %v347
        %v356 = vunpack.c.l.b16 %v348
        %v357 = vpack.c.b16 %v354, %v353
        %v358 = vpack.c.b16 %v356, %v355
        %v362 = vsel %vm319, %v344, 0
        %364 = vmatprep.subr.bf16.mxu0 0
        %365 = vmatpush1.bf16.msra.mxu0 %v357
        %366 = vmatprep.subr.bf16.mxu0 0
        %367 = vmatpush1.bf16.msra.mxu0 %v358
        %368 = vmatprep.subr.bf16.mxu0 0
        %369 = vmatpush1.bf16.msra.mxu0 0
        %370 = vmatprep.subr.bf16.mxu0 0
        %371 = vmatpush1.bf16.msra.mxu0 0
        %372 = vmatprep.subr.bf16.mxu0 0
        %373 = vmatpush1.bf16.msra.mxu0 0
        %374 = vmatprep.subr.bf16.mxu0 0
        %375 = vmatpush1.bf16.msra.mxu0 0
        %376 = vmatprep.subr.bf16.mxu0 0
        %377 = vmatpush1.bf16.msra.mxu0 0
        %378 = vmatprep.subr.bf16.mxu0 0
        %379 = vmatpush1.bf16.msra.mxu0 0
        %380 = vmatprep.subr.bf16.mxu0 0
        %381 = vmatpush1.bf16.msra.mxu0 0
        %382 = vmatprep.subr.bf16.mxu0 0
        %383 = vmatpush1.bf16.msra.mxu0 0
        %384 = vmatprep.subr.bf16.mxu0 0
        %385 = vmatpush1.bf16.msra.mxu0 0
        %386 = vmatprep.subr.bf16.mxu0 0
        %387 = vmatpush1.bf16.msra.mxu0 0
        %388 = vmatprep.subr.bf16.mxu0 0
        %389 = vmatpush1.bf16.msra.mxu0 0
        %390 = vmatprep.subr.bf16.mxu0 0
        %391 = vmatpush1.bf16.msra.mxu0 0
        %392 = vmatprep.subr.bf16.mxu0 0
        %393 = vmatpush1.bf16.msra.mxu0 0
        %394 = vmatprep.subr.bf16.mxu0 0
        %395 = vmatpush1.bf16.msra.mxu0 0
        %396 = vmatprep.mubr.bf16.mxu0 0
        %397 = vmatmul.mubr.bf16.gmra.mrb[0].mxu0 %v362
        %v398 = vpop.f32.mrb[0].mxu0
        %v399 = vadd.f32 0.0, %v398
        %v400 = vpop.f32.mrb[0].mxu0
        %v401 = vpop.f32.mrb[0].mxu0
        %v402 = vadd.f32 0.0, %v401
        %v403 = vpop.f32.mrb[0].mxu0
        %404 = vdwg.mxu0
        %v405 = vpack.c.bf16 %v402, %v399
        %v407 = vunpack.c.l.b16 %v405
        %v408 = vunpack.c.h.b16 %v405
        %v409 = vpack.c.b16 %v407, %v407
        %v410 = vpack.c.b16 %v408, %v408
        %vm413 = vcmask 60416
        %414 = vst.msk [vmem:[%s295] sm:$0xf] %vm413, %v409
        %415 = vst.msk [vmem:[%s295 + $0x4] sm:$0xf] %vm413, %v410
        %416 = vrot.lane.b32.xlu0 %v409, 96
        %v417 = vpop.permute.xlu0 %416
        %418 = vrot.lane.b32.xlu0 %v410, 96
        %v419 = vpop.permute.xlu0 %418
        %422 = vst.msk [vmem:[%s302] sm:$0xf] %vm413, %v417
        %423 = vst.msk [vmem:[%s302 + $0x4] sm:$0xf] %vm413, %v419
        %424 = vrot.lane.b32.xlu0 %v409, 64
        %v425 = vpop.permute.xlu0 %424
        %426 = vrot.lane.b32.xlu0 %v410, 64
        %v427 = vpop.permute.xlu0 %426
        %430 = vst.msk [vmem:[%s309] sm:$0xf] %vm413, %v425
        %431 = vst.msk [vmem:[%s309 + $0x4] sm:$0xf] %vm413, %v427
        %432 = vrot.lane.b32.xlu0 %v409, 120
        %v433 = vpop.permute.xlu0 %432
        %434 = vrot.lane.b32.xlu0 %v410, 120
        %v435 = vpop.permute.xlu0 %434
        %s438 = scalar_lea.vmem %s295, 8 [#allocation8]
        %439 = vst.msk [vmem:[%s438] sm:$0xf] %vm413, %v433
        %440 = vst.msk [vmem:[%s438 + $0x4] sm:$0xf] %vm413, %v435
        %441 = vrot.lane.b32.xlu0 %v409, 88
        %v442 = vpop.permute.xlu0 %441
        %443 = vrot.lane.b32.xlu0 %v410, 88
        %v444 = vpop.permute.xlu0 %443
        %s447 = scalar_lea.vmem %s302, 8 [#allocation9]
        %448 = vst.msk [vmem:[%s447] sm:$0xf] %vm413, %v442
        %449 = vst.msk [vmem:[%s447 + $0x4] sm:$0xf] %vm413, %v444
        %450 = vrot.lane.b32.xlu0 %v409, 56
        %v451 = vpop.permute.xlu0 %450
        %452 = vrot.lane.b32.xlu0 %v410, 56
        %v453 = vpop.permute.xlu0 %452
        %s456 = scalar_lea.vmem %s309, 8 [#allocation11]
        %457 = vst.msk [vmem:[%s456] sm:$0xf] %vm413, %v451
        %458 = vst.msk [vmem:[%s456 + $0x4] sm:$0xf] %vm413, %v453
        %459 = vrot.lane.b32.xlu0 %v409, 112
        %v460 = vpop.permute.xlu0 %459
        %461 = vrot.lane.b32.xlu0 %v410, 112
        %v462 = vpop.permute.xlu0 %461
        %s465 = scalar_lea.vmem %s295, 16 [#allocation8]
        %466 = vst.msk [vmem:[%s465] sm:$0xf] %vm413, %v460
        %467 = vst.msk [vmem:[%s465 + $0x4] sm:$0xf] %vm413, %v462
        %468 = vrot.lane.b32.xlu0 %v409, 80
        %v469 = vpop.permute.xlu0 %468
        %470 = vrot.lane.b32.xlu0 %v410, 80
        %v471 = vpop.permute.xlu0 %470
        %s474 = scalar_lea.vmem %s302, 16 [#allocation9]
        %475 = vst.msk [vmem:[%s474] sm:$0xf] %vm413, %v469
        %476 = vst.msk [vmem:[%s474 + $0x4] sm:$0xf] %vm413, %v471
        %477 = vrot.lane.b32.xlu0 %v409, 48
        %v478 = vpop.permute.xlu0 %477
        %479 = vrot.lane.b32.xlu0 %v410, 48
        %v480 = vpop.permute.xlu0 %479
        %s483 = scalar_lea.vmem %s309, 16 [#allocation11]
        %484 = vst.msk [vmem:[%s483] sm:$0xf] %vm413, %v478
        %485 = vst.msk [vmem:[%s483 + $0x4] sm:$0xf] %vm413, %v480
        %486 = vrot.lane.b32.xlu0 %v409, 104
        %v487 = vpop.permute.xlu0 %486
        %488 = vrot.lane.b32.xlu0 %v410, 104
        %v489 = vpop.permute.xlu0 %488
        %s492 = scalar_lea.vmem %s295, 24 [#allocation8]
        %493 = vst.msk [vmem:[%s492] sm:$0xf] %vm413, %v487
        %494 = vst.msk [vmem:[%s492 + $0x4] sm:$0xf] %vm413, %v489
        %495 = vrot.lane.b32.xlu0 %v409, 72
        %v496 = vpop.permute.xlu0 %495
        %497 = vrot.lane.b32.xlu0 %v410, 72
        %v498 = vpop.permute.xlu0 %497
        %s501 = scalar_lea.vmem %s302, 24 [#allocation9]
        %502 = vst.msk [vmem:[%s501] sm:$0xf] %vm413, %v496
        %503 = vst.msk [vmem:[%s501 + $0x4] sm:$0xf] %vm413, %v498
        %504 = vrot.lane.b32.xlu0 %v409, 40
        %v505 = vpop.permute.xlu0 %504
        %506 = vrot.lane.b32.xlu0 %v410, 40
        %v507 = vpop.permute.xlu0 %506
        %s510 = scalar_lea.vmem %s309, 24 [#allocation11]
        %511 = vst.msk [vmem:[%s510] sm:$0xf] %vm413, %v505
        %512 = vst.msk [vmem:[%s510 + $0x4] sm:$0xf] %vm413, %v507
        %s513 = sand.u32 %s119, 1
        %s514 = scalar_lea.sflag [#allocation4], %s513
        %s515 = sand.u32 %s119, 1
        %s516 = smul.addr %s515, 32
        %s517 = scalar_lea.vmem [#allocation8], %s516
        %s518 = sand.u32 %s27, 1
        %s519 = scalar_lea.sflag [#allocation10], %s518
        %s520 = sand.u32 %s147, 1
        %s521 = smul.addr %s520, 32
        %s522 = scalar_lea.vmem [#allocation9], %s521
        %s523 = sand.u32 %s27, 1
        %s524 = scalar_lea.sflag [#allocation10], %s523
        %s525 = sand.u32 %s175, 1
        %s526 = smul.addr %s525, 32
        %s527 = scalar_lea.vmem [#allocation11], %s526
        // Predicated region
        $region45: #{tpu_custom_call.1} parent=31 // pred_check
          %p528 = pneg %p129
        $region46: #{tpu_custom_call.1} parent=31 // pred_check_branch
          %530 = sbr.rel (%p528) target = $region48
        $region47: #{tpu_custom_call.1} parent=31 // pred_region
          %s531 = smul.u32 2, %s32
          %s533 = ssub.s32 512, 512
          %534 = vsyncadd %s514, %s533
          %s535 = smul.addr %s31, 8
          %s536 = sadd.s32 %s531, %s535
          %s537 = smul.addr %s536, 64
          %s538 = scalar_lea.hbm %s3, %s537
          %s539 = sshll.u32 %s517, 4
          %s540 = int_to_ptr.vmem [resolvable:$true] %s539
          %545 = dma.vmem_to_hbm [thread:$0]  %s540, 512, %s538, %s514, 64, 64, 4
        $region48: #{tpu_custom_call.1} parent=31 // pred_fallthru
          _
        // Predicated region
        $region49: #{tpu_custom_call.1} parent=31 // pred_check
          %p546 = pneg %p157
        $region50: #{tpu_custom_call.1} parent=31 // pred_check_branch
          %548 = sbr.rel (%p546) target = $region52
        $region51: #{tpu_custom_call.1} parent=31 // pred_region
          %s549 = smul.u32 2, %s32
          %s551 = ssub.s32 512, 512
          %552 = vsyncadd %s519, %s551
          %s553 = smul.addr %s31, 8
          %s554 = sadd.s32 %s549, %s553
          %s555 = smul.addr %s554, 64
          %s556 = scalar_lea.hbm %s4, %s555
          %s557 = sshll.u32 %s522, 4
          %s558 = int_to_ptr.vmem [resolvable:$true] %s557
          %563 = dma.vmem_to_hbm [thread:$0]  %s558, 512, %s556, %s519, 64, 64, 4
        $region52: #{tpu_custom_call.1} parent=31 // pred_fallthru
          _
        // Predicated region
        $region53: #{tpu_custom_call.1} parent=31 // pred_check
          %p564 = pneg %p185
        $region54: #{tpu_custom_call.1} parent=31 // pred_check_branch
          %566 = sbr.rel (%p564) target = $region56
        $region55: #{tpu_custom_call.1} parent=31 // pred_region
          %s567 = smul.u32 2, %s32
          %s569 = ssub.s32 512, 512
          %570 = vsyncadd %s524, %s569
          %s571 = smul.addr %s31, 8
          %s572 = sadd.s32 %s567, %s571
          %s573 = smul.addr %s572, 64
          %s574 = scalar_lea.hbm %s5, %s573
          %s575 = sshll.u32 %s527, 4
          %s576 = int_to_ptr.vmem [resolvable:$true] %s575
          %581 = dma.vmem_to_hbm [thread:$0]  %s576, 512, %s574, %s524, 64, 64, 4
        $region56: #{tpu_custom_call.1} parent=31 // pred_fallthru
          _
      $region32: #{tpu_custom_call.1} parent=5 // pred_fallthru
        _
      %p582 = scmp.le.s32.totalorder 2, %s22
      // Predicated region
      $region57: #{tpu_custom_call.1} parent=5 // pred_check
        %p583 = pneg %p582
      $region58: #{tpu_custom_call.1} parent=5 // pred_check_branch
        %585 = sbr.rel (%p583) target = $region60
      $region59: #{tpu_custom_call.1} parent=5 // pred_region
        %s586 = ssub.s32 %s22, 2
        // Predicated region
        $region61: #{tpu_custom_call.1} parent=59 // pred_check
          %p587 = pneg %p135
        $region62: #{tpu_custom_call.1} parent=59 // pred_check_branch
          %589 = sbr.rel (%p587) target = $region64
        $region63: #{tpu_custom_call.1} parent=59 // pred_region
          %s590 = sand.u32 %s120, 1
          %s591 = scalar_lea.sflag [#allocation4], %s590
          %s592 = sand.u32 %s120, 1
          %s593 = smul.addr %s592, 32
          %s594 = scalar_lea.vmem [#allocation8], %s593
          %595 = dma.done %s591, 512
        $region64: #{tpu_custom_call.1} parent=59 // pred_fallthru
          _
        // Predicated region
        $region65: #{tpu_custom_call.1} parent=59 // pred_check
          %p596 = pneg %p163
        $region66: #{tpu_custom_call.1} parent=59 // pred_check_branch
          %598 = sbr.rel (%p596) target = $region68
        $region67: #{tpu_custom_call.1} parent=59 // pred_region
          %s599 = sand.u32 %s28, 1
          %s600 = scalar_lea.sflag [#allocation10], %s599
          %s601 = sand.u32 %s148, 1
          %s602 = smul.addr %s601, 32
          %s603 = scalar_lea.vmem [#allocation9], %s602
          %604 = dma.done %s600, 512
        $region68: #{tpu_custom_call.1} parent=59 // pred_fallthru
          _
        // Predicated region
        $region69: #{tpu_custom_call.1} parent=59 // pred_check
          %p605 = pneg %p191
        $region70: #{tpu_custom_call.1} parent=59 // pred_check_branch
          %607 = sbr.rel (%p605) target = $region72
        $region71: #{tpu_custom_call.1} parent=59 // pred_region
          %s608 = sand.u32 %s28, 1
          %s609 = scalar_lea.sflag [#allocation10], %s608
          %s610 = sand.u32 %s176, 1
          %s611 = smul.addr %s610, 32
          %s612 = scalar_lea.vmem [#allocation11], %s611
          %613 = dma.done %s609, 512
        $region72: #{tpu_custom_call.1} parent=59 // pred_fallthru
          _
      $region60: #{tpu_custom_call.1} parent=5 // pred_fallthru
        _
    $region6: #{tpu_custom_call.1} parent=1 // loop_footer
      %s26 = sadd.s32 1, %s22
    $region7: #{tpu_custom_call.1} parent=1 // loop_footer_branch
      %21 = sbr.rel target = $region3
    $region8: #{tpu_custom_call.1} parent=1 // loop_exit
      _
    %614 = vsyncpa [#allocation3], 1
    %s615 = scalar_lea.sflag [#allocation3], 1
    %616 = vsyncpa %s615, 1
    %617 = vsyncpa [#allocation6], 1
    %618 = vsyncpa [#allocation4], 1
    %s619 = scalar_lea.sflag [#allocation4], 1
    %620 = vsyncpa %s619, 1
    %621 = vsyncpa [#allocation10], 1
    %s622 = scalar_lea.sflag [#allocation10], 1
    %623 = vsyncpa %s622, 1

</llo_original>
